<compile_context>
chip_gen: v7x
topology: tpu7x:2x2x1
jax: 0.10.0
libtpu: 0.0.40
codegen_flags: <defaults>
</compile_context>

<pallas_src>
import functools

import jax
import jax.numpy as jnp
import numpy as np
from jax.experimental import pallas as pl

NEG_SLOPE = 0.01     # torch.nn.LeakyReLU default
BN_EPS = 1e-5        # torch.nn.BatchNorm1d default
GIN_EPS = 0.0        # GINConv default eps
NEG_BIG = -1e30      # mask value for padded class lanes

# Padded tile sizes. Only the lane (last) dims must be 128-wide; the node axis is a
# sublane axis and stays small (32 >= 16 real nodes, aligned to the bf16 16-row pack
# and the f32 8-row tile).
N_PAD = 32           # padded node count (sublane axis)
F_PAD = 128          # padded feature lanes
H_PAD = 128          # padded hidden lanes
C_PAD = 128          # padded class lanes
G_ROWS = 16          # pooling-matrix rows (bf16 sublane pack); >= real graph count


def _leaky_relu(v):
    # 2 VALU ops per element instead of 3 (valid because 0 < NEG_SLOPE < 1).
    return jnp.maximum(v, NEG_SLOPE * v)


def _bn_masked(h, gamma, beta, node_mask, inv_n):
    # BatchNorm1d (training): biased per-feature stats over the *real* node rows only.
    mean = jnp.sum(h * node_mask, axis=0, keepdims=True) * inv_n
    diff = h - mean
    var = jnp.sum(diff * diff * node_mask, axis=0, keepdims=True) * inv_n
    scale = jax.lax.rsqrt(var + BN_EPS) * gamma          # fold gamma into the [1,128] scale
    return diff * scale + beta
    # TODO(synk): on v5e, replace the axis-0 (cross-sublane) sums with [1,N] mask-row MXU
    # matmuls in f32 (XLU is the weak link there); negligible at N=32, so keep it generic.


def gin_forward_kernel(an_ref, x_ref, w_ref, v_ref, out_ref, *, n_real_nodes, inv_n):
    f32 = jnp.float32
    bf16 = jnp.bfloat16

    an = an_ref[...]                        # bf16 [N_PAD + G_ROWS, N_PAD] packed slab
    adj = an[:N_PAD]                        # A + (1 + eps) * I (folded on host)
    pool = an[N_PAD:]                       # one-hot graph pooling matrix [G_ROWS, N_PAD]
    x = x_ref[...]                          # bf16 [N_PAD, F_PAD]

    # Node mask built in-kernel (no [N,1] input DMA); n_real_nodes is static.
    node_mask = (jax.lax.broadcasted_iota(jnp.int32, (N_PAD, 1), 0)
                 < n_real_nodes).astype(f32)

    v = v_ref[...]                          # f32 [16, 128] packed bias/gamma/beta/mask slab
    b1a, b1b, g1, be1 = v[0:1], v[1:2], v[2:3], v[3:4]
    b2a, b2b, g2, be2 = v[4:5], v[5:6], v[6:7], v[7:8]
    bf1, bf2, cmask = v[8:9], v[9:10], v[10:11]

    # ---- GINConv 1: nn1((A + (1+eps)I) @ x), nn1 = Linear -> LeakyReLU -> Linear
    agg = jnp.dot(adj, x, preferred_element_type=f32)
    h = _leaky_relu(jnp.dot(agg.astype(bf16), w_ref[0], preferred_element_type=f32) + b1a)
    h = jnp.dot(h.astype(bf16), w_ref[1], preferred_element_type=f32) + b1b
    h = _leaky_relu(h)                      # outer F.leaky_relu
    h = _bn_masked(h, g1, be1, node_mask, inv_n)

    # ---- GINConv 2
    agg2 = jnp.dot(adj, h.astype(bf16), preferred_element_type=f32)
    h2 = _leaky_relu(jnp.dot(agg2.astype(bf16), w_ref[2], preferred_element_type=f32) + b2a)
    h2 = jnp.dot(h2.astype(bf16), w_ref[3], preferred_element_type=f32) + b2b
    h2 = _leaky_relu(h2)
    h2 = _bn_masked(h2, g2, be2, node_mask, inv_n)

    # ---- global_add_pool (one-hot pooling matmul; padded node columns are zero)
    pooled = jnp.dot(pool, h2.astype(bf16), preferred_element_type=f32)

    # ---- fc1 -> leaky_relu -> dropout(p=0.0, identity) -> fc2
    f = _leaky_relu(jnp.dot(pooled.astype(bf16), w_ref[4], preferred_element_type=f32) + bf1)
    logits = jnp.dot(f.astype(bf16), w_ref[5], preferred_element_type=f32) + bf2

    # ---- log_softmax over the real class lanes only
    logits = jnp.where(cmask > 0, logits, NEG_BIG)
    m = jnp.max(logits, axis=-1, keepdims=True)
    s = logits - m
    lse = jnp.log(jnp.sum(jnp.where(cmask > 0, jnp.exp(s), 0.0), axis=-1, keepdims=True))
    out_ref[...] = jnp.where(cmask > 0, s - lse, 0.0)


def _full_spec(shape):
    # Whole (padded, lane-dense) array resident in VMEM; no grid needed at these sizes.
    return pl.BlockSpec(shape, lambda: (0,) * len(shape))


@functools.partial(jax.jit, static_argnames=("n_real_nodes",))
def gin_forward_padded(an_slab, x, wslab, vslab, *, n_real_nodes):
    kernel = functools.partial(gin_forward_kernel,
                               n_real_nodes=n_real_nodes,
                               inv_n=1.0 / float(n_real_nodes))
    inputs = (an_slab, x, wslab, vslab)
    return pl.pallas_call(
        kernel,
        out_shape=jax.ShapeDtypeStruct((G_ROWS, C_PAD), jnp.float32),
        in_specs=[_full_spec(a.shape) for a in inputs],
        out_specs=_full_spec((G_ROWS, C_PAD)),
    )(*inputs)
    # TODO(synk): for large node counts, tile the adjacency over a grid (256-wide tiles on
    # v6e/v7x, 128 on v5e), add a leading "parallel" axis for v7x's two TensorCores, and
    # budget double-buffered tiles against v7x's 64 MiB VMEM via CompilerParams. If many
    # graph mini-batches are run, stack them along a grid axis to amortize call overhead.


def xavier_uniform(key, fan_in, fan_out):
    limit = float(np.sqrt(6.0 / (fan_in + fan_out)))
    return np.asarray(jax.random.uniform(key, (fan_in, fan_out), jnp.float32, -limit, limit))


def linear_bias(key, fan_in, fan_out):
    bound = float(1.0 / np.sqrt(fan_in))
    return np.asarray(jax.random.uniform(key, (fan_out,), jnp.float32, -bound, bound))


def _pad2(a, rows, cols):
    out = np.zeros((rows, cols), np.float32)
    out[: a.shape[0], : a.shape[1]] = a
    return out


def _pad1(a, cols):
    out = np.zeros((cols,), np.float32)
    out[: a.shape[0]] = a
    return out


if __name__ == "__main__":
    # Real problem sizes (consistent with the module): num_node_features=8, num_hidden=32,
    # num_classes=4, 2 graphs x 8 nodes = 16 nodes.
    N_NODES, N_FEAT, HIDDEN, N_CLASSES, N_GRAPHS = 16, 8, 32, 4, 2

    key = jax.random.PRNGKey(0)
    keys = jax.random.split(key, 16)

    # Node features, zero-padded to [N_PAD, F_PAD].
    x_real = np.asarray(jax.random.normal(keys[0], (N_NODES, N_FEAT), jnp.float32))
    x_pad = _pad2(x_real, N_PAD, F_PAD)

    # Deterministic graph structure: two disjoint rings of 8 nodes, bidirectional edges.
    adj_np = np.zeros((N_PAD, N_PAD), np.float32)
    for g in range(N_GRAPHS):
        base = g * 8
        for i in range(8):
            a, b = base + i, base + (i + 1) % 8
            adj_np[b, a] += 1.0   # message flows source -> target (sum aggregation)
            adj_np[a, b] += 1.0
    # Fold the GIN self-term (1 + eps) * I into the adjacency once, on host. Only real
    # node rows get the diagonal so padded rows/cols stay inert even if padded features
    # ever become nonzero.
    adj_np[np.arange(N_NODES), np.arange(N_NODES)] += (1.0 + GIN_EPS)

    # One-hot pooling matrix [G_ROWS, N_PAD]; padded graph rows / node columns are zero.
    batch_np = np.repeat(np.arange(N_GRAPHS), 8)
    pool_np = np.zeros((G_ROWS, N_PAD), np.float32)
    pool_np[batch_np, np.arange(N_NODES)] = 1.0

    # Pack adjacency + pooling matrix into one bf16 slab (shared N_PAD lane dim).
    an_np = np.concatenate([adj_np, pool_np], axis=0)    # [N_PAD + G_ROWS, N_PAD]

    # Weights (xavier_uniform as in reset_parameters), zero-padded to [128, 128] each,
    # packed into one bf16 slab [6, 128, 128].
    w1a = _pad2(xavier_uniform(keys[1], N_FEAT, HIDDEN), F_PAD, H_PAD)
    w1b = _pad2(xavier_uniform(keys[3], HIDDEN, HIDDEN), H_PAD, H_PAD)
    w2a = _pad2(xavier_uniform(keys[5], HIDDEN, HIDDEN), H_PAD, H_PAD)
    w2b = _pad2(xavier_uniform(keys[7], HIDDEN, HIDDEN), H_PAD, H_PAD)
    wf1 = _pad2(xavier_uniform(keys[9], HIDDEN, HIDDEN), H_PAD, H_PAD)
    wf2 = _pad2(xavier_uniform(keys[11], HIDDEN, N_CLASSES), H_PAD, C_PAD)
    wslab = jnp.asarray(np.stack([w1a, w1b, w2a, w2b, wf1, wf2], axis=0), jnp.bfloat16)

    # Biases (PyTorch Linear default), BN gamma/beta, and class mask packed into one
    # f32 [16, 128] slab (rows: b1a,b1b,g1,be1,b2a,b2b,g2,be2,bf1,bf2,cmask,0...).
    vslab_np = np.zeros((16, 128), np.float32)
    vslab_np[0] = _pad1(linear_bias(keys[2], N_FEAT, HIDDEN), 128)
    vslab_np[1] = _pad1(linear_bias(keys[4], HIDDEN, HIDDEN), 128)
    vslab_np[2, :HIDDEN] = 1.0                                    # bn1 gamma
    # row 3: bn1 beta = 0
    vslab_np[4] = _pad1(linear_bias(keys[6], HIDDEN, HIDDEN), 128)
    vslab_np[5] = _pad1(linear_bias(keys[8], HIDDEN, HIDDEN), 128)
    vslab_np[6, :HIDDEN] = 1.0                                    # bn2 gamma
    # row 7: bn2 beta = 0
    vslab_np[8] = _pad1(linear_bias(keys[10], HIDDEN, HIDDEN), 128)
    vslab_np[9] = _pad1(linear_bias(keys[12], HIDDEN, N_CLASSES), 128)
    vslab_np[10, :N_CLASSES] = 1.0                                # class mask

    an_slab = jnp.asarray(an_np, jnp.bfloat16)     # small int counts + 1 and 0/1: exact in bf16
    x = jnp.asarray(x_pad, jnp.bfloat16)
    vslab = jnp.asarray(vslab_np, jnp.float32)

    out_pad = gin_forward_padded(an_slab, x, wslab, vslab, n_real_nodes=N_NODES)
    jax.block_until_ready(out_pad)
    out = out_pad[:N_GRAPHS, :N_CLASSES]           # slice away padded graphs / classes

    assert out.shape == (N_GRAPHS, N_CLASSES)
    # log_softmax rows should (approximately) exponentiate-sum to 1.
    assert bool(jnp.all(jnp.abs(jnp.sum(jnp.exp(out), axis=-1) - 1.0) < 1e-3))
    # TODO(synk): graph_embedding_function hook and nonzero dropout (p=0.0 here) are not modeled.
    print("KERNEL_OK")
</pallas_src>

<mosaic_0001>
module attributes {stable_mosaic.version = 11 : i64} {
  func.func @gin_forward_kernel(%arg0: memref<48x32xbf16, #tpu.memory_space<vmem>>, %arg1: memref<32x128xbf16, #tpu.memory_space<vmem>>, %arg2: memref<6x128x128xbf16, #tpu.memory_space<vmem>>, %arg3: memref<16x128xf32, #tpu.memory_space<vmem>>, %arg4: memref<16x128xf32, #tpu.memory_space<vmem>>) attributes {dimension_semantics = [], scalar_prefetch = 0 : i64, scratch_operands = 0 : i64, tpu.core_type = #tpu.core_type<tc>} {
    %c0 = arith.constant 0 : index
    %c0_0 = arith.constant 0 : index
    %0 = vector.load %arg0[%c0, %c0_0] : memref<48x32xbf16, #tpu.memory_space<vmem>>, vector<48x32xbf16>
    %1 = vector.extract_strided_slice %0 {offsets = [0, 0], sizes = [32, 32], strides = [1, 1]} : vector<48x32xbf16> to vector<32x32xbf16>
    %2 = vector.extract_strided_slice %0 {offsets = [32, 0], sizes = [16, 32], strides = [1, 1]} : vector<48x32xbf16> to vector<16x32xbf16>
    %c0_1 = arith.constant 0 : index
    %c0_2 = arith.constant 0 : index
    %3 = vector.load %arg1[%c0_1, %c0_2] : memref<32x128xbf16, #tpu.memory_space<vmem>>, vector<32x128xbf16>
    %4 = tpu.iota {dimensions = array<i32: 0>} : vector<32x1xi32>
    %c16_i32 = arith.constant 16 : i32
    %5 = vector.broadcast %c16_i32 : i32 to vector<32x1xi32>
    %6 = arith.cmpi slt, %4, %5 : vector<32x1xi32>
    %7 = arith.extui %6 : vector<32x1xi1> to vector<32x1xi32>
    %8 = arith.sitofp %7 : vector<32x1xi32> to vector<32x1xf32>
    %c0_3 = arith.constant 0 : index
    %c0_4 = arith.constant 0 : index
    %9 = vector.load %arg3[%c0_3, %c0_4] : memref<16x128xf32, #tpu.memory_space<vmem>>, vector<16x128xf32>
    %10 = vector.extract_strided_slice %9 {offsets = [0, 0], sizes = [1, 128], strides = [1, 1]} : vector<16x128xf32> to vector<1x128xf32>
    %11 = vector.extract_strided_slice %9 {offsets = [1, 0], sizes = [1, 128], strides = [1, 1]} : vector<16x128xf32> to vector<1x128xf32>
    %12 = vector.extract_strided_slice %9 {offsets = [2, 0], sizes = [1, 128], strides = [1, 1]} : vector<16x128xf32> to vector<1x128xf32>
    %13 = vector.extract_strided_slice %9 {offsets = [3, 0], sizes = [1, 128], strides = [1, 1]} : vector<16x128xf32> to vector<1x128xf32>
    %14 = vector.extract_strided_slice %9 {offsets = [4, 0], sizes = [1, 128], strides = [1, 1]} : vector<16x128xf32> to vector<1x128xf32>
    %15 = vector.extract_strided_slice %9 {offsets = [5, 0], sizes = [1, 128], strides = [1, 1]} : vector<16x128xf32> to vector<1x128xf32>
    %16 = vector.extract_strided_slice %9 {offsets = [6, 0], sizes = [1, 128], strides = [1, 1]} : vector<16x128xf32> to vector<1x128xf32>
    %17 = vector.extract_strided_slice %9 {offsets = [7, 0], sizes = [1, 128], strides = [1, 1]} : vector<16x128xf32> to vector<1x128xf32>
    %18 = vector.extract_strided_slice %9 {offsets = [8, 0], sizes = [1, 128], strides = [1, 1]} : vector<16x128xf32> to vector<1x128xf32>
    %19 = vector.extract_strided_slice %9 {offsets = [9, 0], sizes = [1, 128], strides = [1, 1]} : vector<16x128xf32> to vector<1x128xf32>
    %20 = vector.extract_strided_slice %9 {offsets = [10, 0], sizes = [1, 128], strides = [1, 1]} : vector<16x128xf32> to vector<1x128xf32>
    %cst = arith.constant dense<0.000000e+00> : vector<32x128xf32>
    %21 = tpu.matmul %1, %3, %cst {dimension_numbers = #tpu.dot_dimension_numbers<[1], [0], [0], [1], [0, 0, 1, 1], [], []>} : vector<32x32xbf16>, vector<32x128xbf16>, vector<32x128xf32> -> vector<32x128xf32>
    %22 = arith.truncf %21 : vector<32x128xf32> to vector<32x128xbf16>
    %c0_5 = arith.constant 0 : index
    %c0_6 = arith.constant 0 : index
    %c0_7 = arith.constant 0 : index
    %23 = vector.load %arg2[%c0_5, %c0_6, %c0_7] : memref<6x128x128xbf16, #tpu.memory_space<vmem>>, vector<1x128x128xbf16>
    %24 = vector.shape_cast %23 : vector<1x128x128xbf16> to vector<128x128xbf16>
    %cst_8 = arith.constant dense<0.000000e+00> : vector<32x128xf32>
    %25 = tpu.matmul %22, %24, %cst_8 {dimension_numbers = #tpu.dot_dimension_numbers<[1], [0], [0], [1], [0, 0, 1, 1], [], []>} : vector<32x128xbf16>, vector<128x128xbf16>, vector<32x128xf32> -> vector<32x128xf32>
    %26 = vector.broadcast %10 : vector<1x128xf32> to vector<32x128xf32>
    %27 = arith.addf %25, %26 : vector<32x128xf32>
    %cst_9 = arith.constant 0.00999999977 : f32
    %28 = vector.broadcast %cst_9 : f32 to vector<32x128xf32>
    %29 = arith.mulf %28, %27 : vector<32x128xf32>
    %30 = arith.maximumf %27, %29 : vector<32x128xf32>
    %31 = arith.truncf %30 : vector<32x128xf32> to vector<32x128xbf16>
    %c1 = arith.constant 1 : index
    %c0_10 = arith.constant 0 : index
    %c0_11 = arith.constant 0 : index
    %32 = vector.load %arg2[%c1, %c0_10, %c0_11] : memref<6x128x128xbf16, #tpu.memory_space<vmem>>, vector<1x128x128xbf16>
    %33 = vector.shape_cast %32 : vector<1x128x128xbf16> to vector<128x128xbf16>
    %cst_12 = arith.constant dense<0.000000e+00> : vector<32x128xf32>
    %34 = tpu.matmul %31, %33, %cst_12 {dimension_numbers = #tpu.dot_dimension_numbers<[1], [0], [0], [1], [0, 0, 1, 1], [], []>} : vector<32x128xbf16>, vector<128x128xbf16>, vector<32x128xf32> -> vector<32x128xf32>
    %35 = vector.broadcast %11 : vector<1x128xf32> to vector<32x128xf32>
    %36 = arith.addf %34, %35 : vector<32x128xf32>
    %cst_13 = arith.constant 0.00999999977 : f32
    %37 = vector.broadcast %cst_13 : f32 to vector<32x128xf32>
    %38 = arith.mulf %37, %36 : vector<32x128xf32>
    %39 = arith.maximumf %36, %38 : vector<32x128xf32>
    %40 = vector.broadcast %8 : vector<32x1xf32> to vector<32x128xf32>
    %41 = arith.mulf %39, %40 : vector<32x128xf32>
    %cst_14 = arith.constant dense<0.000000e+00> : vector<128xf32>
    %42 = vector.multi_reduction <add>, %41, %cst_14 [0] : vector<32x128xf32> to vector<128xf32>
    %43 = vector.shape_cast %42 : vector<128xf32> to vector<1x128xf32>
    %cst_15 = arith.constant 6.250000e-02 : f32
    %44 = vector.broadcast %cst_15 : f32 to vector<1x128xf32>
    %45 = arith.mulf %43, %44 : vector<1x128xf32>
    %46 = vector.broadcast %45 : vector<1x128xf32> to vector<32x128xf32>
    %47 = arith.subf %39, %46 : vector<32x128xf32>
    %48 = arith.mulf %47, %47 : vector<32x128xf32>
    %49 = vector.broadcast %8 : vector<32x1xf32> to vector<32x128xf32>
    %50 = arith.mulf %48, %49 : vector<32x128xf32>
    %cst_16 = arith.constant dense<0.000000e+00> : vector<128xf32>
    %51 = vector.multi_reduction <add>, %50, %cst_16 [0] : vector<32x128xf32> to vector<128xf32>
    %52 = vector.shape_cast %51 : vector<128xf32> to vector<1x128xf32>
    %cst_17 = arith.constant 6.250000e-02 : f32
    %53 = vector.broadcast %cst_17 : f32 to vector<1x128xf32>
    %54 = arith.mulf %52, %53 : vector<1x128xf32>
    %cst_18 = arith.constant 9.99999974E-6 : f32
    %55 = vector.broadcast %cst_18 : f32 to vector<1x128xf32>
    %56 = arith.addf %54, %55 : vector<1x128xf32>
    %57 = math.rsqrt %56 : vector<1x128xf32>
    %58 = arith.mulf %57, %12 : vector<1x128xf32>
    %59 = vector.broadcast %58 : vector<1x128xf32> to vector<32x128xf32>
    %60 = arith.mulf %47, %59 : vector<32x128xf32>
    %61 = vector.broadcast %13 : vector<1x128xf32> to vector<32x128xf32>
    %62 = arith.addf %60, %61 : vector<32x128xf32>
    %63 = arith.truncf %62 : vector<32x128xf32> to vector<32x128xbf16>
    %cst_19 = arith.constant dense<0.000000e+00> : vector<32x128xf32>
    %64 = tpu.matmul %1, %63, %cst_19 {dimension_numbers = #tpu.dot_dimension_numbers<[1], [0], [0], [1], [0, 0, 1, 1], [], []>} : vector<32x32xbf16>, vector<32x128xbf16>, vector<32x128xf32> -> vector<32x128xf32>
    %65 = arith.truncf %64 : vector<32x128xf32> to vector<32x128xbf16>
    %c2 = arith.constant 2 : index
    %c0_20 = arith.constant 0 : index
    %c0_21 = arith.constant 0 : index
    %66 = vector.load %arg2[%c2, %c0_20, %c0_21] : memref<6x128x128xbf16, #tpu.memory_space<vmem>>, vector<1x128x128xbf16>
    %67 = vector.shape_cast %66 : vector<1x128x128xbf16> to vector<128x128xbf16>
    %cst_22 = arith.constant dense<0.000000e+00> : vector<32x128xf32>
    %68 = tpu.matmul %65, %67, %cst_22 {dimension_numbers = #tpu.dot_dimension_numbers<[1], [0], [0], [1], [0, 0, 1, 1], [], []>} : vector<32x128xbf16>, vector<128x128xbf16>, vector<32x128xf32> -> vector<32x128xf32>
    %69 = vector.broadcast %14 : vector<1x128xf32> to vector<32x128xf32>
    %70 = arith.addf %68, %69 : vector<32x128xf32>
    %cst_23 = arith.constant 0.00999999977 : f32
    %71 = vector.broadcast %cst_23 : f32 to vector<32x128xf32>
    %72 = arith.mulf %71, %70 : vector<32x128xf32>
    %73 = arith.maximumf %70, %72 : vector<32x128xf32>
    %74 = arith.truncf %73 : vector<32x128xf32> to vector<32x128xbf16>
    %c3 = arith.constant 3 : index
    %c0_24 = arith.constant 0 : index
    %c0_25 = arith.constant 0 : index
    %75 = vector.load %arg2[%c3, %c0_24, %c0_25] : memref<6x128x128xbf16, #tpu.memory_space<vmem>>, vector<1x128x128xbf16>
    %76 = vector.shape_cast %75 : vector<1x128x128xbf16> to vector<128x128xbf16>
    %cst_26 = arith.constant dense<0.000000e+00> : vector<32x128xf32>
    %77 = tpu.matmul %74, %76, %cst_26 {dimension_numbers = #tpu.dot_dimension_numbers<[1], [0], [0], [1], [0, 0, 1, 1], [], []>} : vector<32x128xbf16>, vector<128x128xbf16>, vector<32x128xf32> -> vector<32x128xf32>
    %78 = vector.broadcast %15 : vector<1x128xf32> to vector<32x128xf32>
    %79 = arith.addf %77, %78 : vector<32x128xf32>
    %cst_27 = arith.constant 0.00999999977 : f32
    %80 = vector.broadcast %cst_27 : f32 to vector<32x128xf32>
    %81 = arith.mulf %80, %79 : vector<32x128xf32>
    %82 = arith.maximumf %79, %81 : vector<32x128xf32>
    %83 = vector.broadcast %8 : vector<32x1xf32> to vector<32x128xf32>
    %84 = arith.mulf %82, %83 : vector<32x128xf32>
    %cst_28 = arith.constant dense<0.000000e+00> : vector<128xf32>
    %85 = vector.multi_reduction <add>, %84, %cst_28 [0] : vector<32x128xf32> to vector<128xf32>
    %86 = vector.shape_cast %85 : vector<128xf32> to vector<1x128xf32>
    %cst_29 = arith.constant 6.250000e-02 : f32
    %87 = vector.broadcast %cst_29 : f32 to vector<1x128xf32>
    %88 = arith.mulf %86, %87 : vector<1x128xf32>
    %89 = vector.broadcast %88 : vector<1x128xf32> to vector<32x128xf32>
    %90 = arith.subf %82, %89 : vector<32x128xf32>
    %91 = arith.mulf %90, %90 : vector<32x128xf32>
    %92 = vector.broadcast %8 : vector<32x1xf32> to vector<32x128xf32>
    %93 = arith.mulf %91, %92 : vector<32x128xf32>
    %cst_30 = arith.constant dense<0.000000e+00> : vector<128xf32>
    %94 = vector.multi_reduction <add>, %93, %cst_30 [0] : vector<32x128xf32> to vector<128xf32>
    %95 = vector.shape_cast %94 : vector<128xf32> to vector<1x128xf32>
    %cst_31 = arith.constant 6.250000e-02 : f32
    %96 = vector.broadcast %cst_31 : f32 to vector<1x128xf32>
    %97 = arith.mulf %95, %96 : vector<1x128xf32>
    %cst_32 = arith.constant 9.99999974E-6 : f32
    %98 = vector.broadcast %cst_32 : f32 to vector<1x128xf32>
    %99 = arith.addf %97, %98 : vector<1x128xf32>
    %100 = math.rsqrt %99 : vector<1x128xf32>
    %101 = arith.mulf %100, %16 : vector<1x128xf32>
    %102 = vector.broadcast %101 : vector<1x128xf32> to vector<32x128xf32>
    %103 = arith.mulf %90, %102 : vector<32x128xf32>
    %104 = vector.broadcast %17 : vector<1x128xf32> to vector<32x128xf32>
    %105 = arith.addf %103, %104 : vector<32x128xf32>
    %106 = arith.truncf %105 : vector<32x128xf32> to vector<32x128xbf16>
    %cst_33 = arith.constant dense<0.000000e+00> : vector<16x128xf32>
    %107 = tpu.matmul %2, %106, %cst_33 {dimension_numbers = #tpu.dot_dimension_numbers<[1], [0], [0], [1], [0, 0, 1, 1], [], []>} : vector<16x32xbf16>, vector<32x128xbf16>, vector<16x128xf32> -> vector<16x128xf32>
    %108 = arith.truncf %107 : vector<16x128xf32> to vector<16x128xbf16>
    %c4 = arith.constant 4 : index
    %c0_34 = arith.constant 0 : index
    %c0_35 = arith.constant 0 : index
    %109 = vector.load %arg2[%c4, %c0_34, %c0_35] : memref<6x128x128xbf16, #tpu.memory_space<vmem>>, vector<1x128x128xbf16>
    %110 = vector.shape_cast %109 : vector<1x128x128xbf16> to vector<128x128xbf16>
    %cst_36 = arith.constant dense<0.000000e+00> : vector<16x128xf32>
    %111 = tpu.matmul %108, %110, %cst_36 {dimension_numbers = #tpu.dot_dimension_numbers<[1], [0], [0], [1], [0, 0, 1, 1], [], []>} : vector<16x128xbf16>, vector<128x128xbf16>, vector<16x128xf32> -> vector<16x128xf32>
    %112 = vector.broadcast %18 : vector<1x128xf32> to vector<16x128xf32>
    %113 = arith.addf %111, %112 : vector<16x128xf32>
    %cst_37 = arith.constant 0.00999999977 : f32
    %114 = vector.broadcast %cst_37 : f32 to vector<16x128xf32>
    %115 = arith.mulf %114, %113 : vector<16x128xf32>
    %116 = arith.maximumf %113, %115 : vector<16x128xf32>
    %117 = arith.truncf %116 : vector<16x128xf32> to vector<16x128xbf16>
    %c5 = arith.constant 5 : index
    %c0_38 = arith.constant 0 : index
    %c0_39 = arith.constant 0 : index
    %118 = vector.load %arg2[%c5, %c0_38, %c0_39] : memref<6x128x128xbf16, #tpu.memory_space<vmem>>, vector<1x128x128xbf16>
    %119 = vector.shape_cast %118 : vector<1x128x128xbf16> to vector<128x128xbf16>
    %cst_40 = arith.constant dense<0.000000e+00> : vector<16x128xf32>
    %120 = tpu.matmul %117, %119, %cst_40 {dimension_numbers = #tpu.dot_dimension_numbers<[1], [0], [0], [1], [0, 0, 1, 1], [], []>} : vector<16x128xbf16>, vector<128x128xbf16>, vector<16x128xf32> -> vector<16x128xf32>
    %121 = vector.broadcast %19 : vector<1x128xf32> to vector<16x128xf32>
    %122 = arith.addf %120, %121 : vector<16x128xf32>
    %cst_41 = arith.constant 0.000000e+00 : f32
    %123 = vector.broadcast %cst_41 : f32 to vector<1x128xf32>
    %124 = arith.cmpf ogt, %20, %123 : vector<1x128xf32>
    %cst_42 = arith.constant -1.000000e+30 : f32
    %125 = vector.shape_cast %124 : vector<1x128xi1> to vector<1x128xi1>
    %126 = vector.broadcast %125 : vector<1x128xi1> to vector<16x128xi1>
    %127 = vector.broadcast %cst_42 : f32 to vector<16x128xf32>
    %128 = arith.select %126, %122, %127 : vector<16x128xi1>, vector<16x128xf32>
    %cst_43 = arith.constant dense<0xFF800000> : vector<16xf32>
    %129 = vector.multi_reduction <maximumf>, %128, %cst_43 [1] : vector<16x128xf32> to vector<16xf32>
    %130 = vector.shape_cast %129 : vector<16xf32> to vector<16x1xf32>
    %131 = vector.broadcast %130 : vector<16x1xf32> to vector<16x128xf32>
    %132 = arith.subf %128, %131 : vector<16x128xf32>
    %cst_44 = arith.constant 0.000000e+00 : f32
    %133 = vector.broadcast %cst_44 : f32 to vector<1x128xf32>
    %134 = arith.cmpf ogt, %20, %133 : vector<1x128xf32>
    %135 = math.exp %132 : vector<16x128xf32>
    %cst_45 = arith.constant 0.000000e+00 : f32
    %136 = vector.shape_cast %134 : vector<1x128xi1> to vector<1x128xi1>
    %137 = vector.broadcast %136 : vector<1x128xi1> to vector<16x128xi1>
    %138 = vector.broadcast %cst_45 : f32 to vector<16x128xf32>
    %139 = arith.select %137, %135, %138 : vector<16x128xi1>, vector<16x128xf32>
    %cst_46 = arith.constant dense<0.000000e+00> : vector<16xf32>
    %140 = vector.multi_reduction <add>, %139, %cst_46 [1] : vector<16x128xf32> to vector<16xf32>
    %141 = vector.shape_cast %140 : vector<16xf32> to vector<16x1xf32>
    %142 = math.log %141 : vector<16x1xf32>
    %cst_47 = arith.constant 0.000000e+00 : f32
    %143 = vector.broadcast %cst_47 : f32 to vector<1x128xf32>
    %144 = arith.cmpf ogt, %20, %143 : vector<1x128xf32>
    %145 = vector.broadcast %142 : vector<16x1xf32> to vector<16x128xf32>
    %146 = arith.subf %132, %145 : vector<16x128xf32>
    %cst_48 = arith.constant 0.000000e+00 : f32
    %147 = vector.shape_cast %144 : vector<1x128xi1> to vector<1x128xi1>
    %148 = vector.broadcast %147 : vector<1x128xi1> to vector<16x128xi1>
    %149 = vector.broadcast %cst_48 : f32 to vector<16x128xf32>
    %150 = arith.select %148, %146, %149 : vector<16x128xi1>, vector<16x128xf32>
    %c0_49 = arith.constant 0 : index
    %c0_50 = arith.constant 0 : index
    %151 = vector.load %arg4[%c0_49, %c0_50] : memref<16x128xf32, #tpu.memory_space<vmem>>, vector<16x128xf32>
    tpu.vector_store %arg4[%c0_49, %c0_50], %150 {strides = array<i32>} : memref<16x128xf32, #tpu.memory_space<vmem>>, vector<16x128xf32>,
    return
  }
}

</mosaic_0001>

<llo_original>
// kernel: gin_forward_padded.1
$region0: #{gin_forward_padded.1}
  #allocation0 [shape = 'u32[]', space=smem, size = 0x4, offset = 0x4, fixed_abs, tag = 'smem constant byte address 0x4 - core index']
  #allocation1 [shape = 'u32[144,128]{1,0:T(1,128)}', space=vmem, size = 0x12000, scoped, tag = 'internal scratch']
  %s0 = inlined_call_operand.vmem [shape: bf16[48,32], index: 0, kind: input, shape index: {}]
  %s1 = inlined_call_operand.vmem [shape: bf16[32,128], index: 1, kind: input, shape index: {}]
  %s2 = inlined_call_operand.hbm [shape: bf16[6,128,128], index: 2, kind: input, shape index: {}]
  %s3 = inlined_call_operand.vmem [shape: f32[16,128], index: 3, kind: input, shape index: {}]
  %s4 = inlined_call_operand.hbm [shape: f32[16,128], index: 4, kind: output, shape index: {}]
  %s5 = sld [smem:[#allocation0]]
  $region30: #{gin_forward_padded.1} parent=0
    _
  %s7 = ssub.s32 1, %s5
  %s8 = scalar_select 0, %s7, %s5
  $region1: #{gin_forward_padded.1} parent=0
    #allocation2 [shape = 'u8[196608]{0}', space=vmem, size = 0x30000, scoped, tag = 'input window, operand 2, single buffered']
    #allocation3 [shape = 's32[1]{0}', space=sflag, size = 0x4, scoped, tag = 'scoped memory for gin_forward_padded.1']
    #allocation4 [shape = 's32[1]{0}', space=sflag, size = 0x4, scoped, tag = 'scoped memory for gin_forward_padded.1']
    #allocation5 [shape = 'u8[8192]{0}', space=vmem, size = 0x2000, scoped, tag = 'output window, operand 0, single buffered']
    %9 = vsyncpa [#allocation3], 0
    %10 = vsyncpa [#allocation4], 0
    // Predicated region
    $region2: #{gin_forward_padded.1} parent=1 // pred_check
      _
    $region3: #{gin_forward_padded.1} parent=1 // pred_check_branch
      %12 = sbr.rel (0) target = $region5
    $region4: #{gin_forward_padded.1} parent=1 // pred_region
      _
    $region5: #{gin_forward_padded.1} parent=1 // pred_fallthru
      _
    // Predicated region
    $region6: #{gin_forward_padded.1} parent=1 // pred_check
      _
    $region7: #{gin_forward_padded.1} parent=1 // pred_check_branch
      %14 = sbr.rel (0) target = $region9
    $region8: #{gin_forward_padded.1} parent=1 // pred_region
      _
    $region9: #{gin_forward_padded.1} parent=1 // pred_fallthru
      _
    // Predicated region
    $region10: #{gin_forward_padded.1} parent=1 // pred_check
      _
    $region11: #{gin_forward_padded.1} parent=1 // pred_check_branch
      %16 = sbr.rel (0) target = $region13
    $region12: #{gin_forward_padded.1} parent=1 // pred_region
      %s18 = ssub.s32 6144, 6144
      %19 = vsyncadd [#allocation3], %s18
      %s20 = sshll.u32 [#allocation2], 4
      %s21 = int_to_ptr.vmem [resolvable:$true] %s20
      %26 = dma.hbm_to_vmem [thread:$0]  %s2, 6144, %s21, [#allocation3], 64, 64, 4
    $region13: #{gin_forward_padded.1} parent=1 // pred_fallthru
      _
    // Predicated region
    $region14: #{gin_forward_padded.1} parent=1 // pred_check
      _
    $region15: #{gin_forward_padded.1} parent=1 // pred_check_branch
      %28 = sbr.rel (0) target = $region17
    $region16: #{gin_forward_padded.1} parent=1 // pred_region
      _
    $region17: #{gin_forward_padded.1} parent=1 // pred_fallthru
      _
    // Predicated region
    $region18: #{gin_forward_padded.1} parent=1 // pred_check
      _
    $region19: #{gin_forward_padded.1} parent=1 // pred_check_branch
      %30 = sbr.rel (0) target = $region21
    $region20: #{gin_forward_padded.1} parent=1 // pred_region
      %31 = dma.done [#allocation3], 6144
    $region21: #{gin_forward_padded.1} parent=1 // pred_fallthru
      _
    %v33 = vld [vmem:[%s0] sm:$0xf]
    %v34 = vld [vmem:[%s0 + $0x4] sm:$0xf]
    %v35 = vld [vmem:[%s0 + $0x8] sm:$0xf]
    %v36 = vld [vmem:[%s0 + $0xc] sm:$0xf]
    %v37 = vld [vmem:[%s0 + $0x10] sm:$0xf]
    %v38 = vld [vmem:[%s0 + $0x14] sm:$0xf]
    %v39 = vld [vmem:[%s1] sm:$0xf]
    %v40 = vld [vmem:[%s1 + $0x4] sm:$0xf]
    %v41 = vld [vmem:[%s1 + $0x8] sm:$0xf]
    %v42 = vld [vmem:[%s1 + $0xc] sm:$0xf]
    %v43 = vlaneseq
    %v44 = vshrl.u32 %v43, 7
    %v45 = vadd.s32 %v44, 8
    %v46 = vadd.s32 %v44, 16
    %v47 = vadd.s32 %v44, 24
    %vm48 = vcmp.lt.s32.totalorder %v44, 16
    %vm49 = vcmp.lt.s32.totalorder %v45, 16
    %vm50 = vcmp.lt.s32.totalorder %v46, 16
    %vm51 = vcmp.lt.s32.totalorder %v47, 16
    %v52 = vsel %vm48, 1, 0
    %v53 = vsel %vm49, 1, 0
    %v54 = vsel %vm50, 1, 0
    %v55 = vsel %vm51, 1, 0
    %v56 = vcvt.s32.f32 %v52
    %v57 = vcvt.s32.f32 %v53
    %v58 = vcvt.s32.f32 %v54
    %v59 = vcvt.s32.f32 %v55
    %v60 = vld [vmem:[%s3] sm:$0xff]
    %v61 = vld [vmem:[%s3 + $0x8] sm:$0xff]
    %v66 = vunpack.c.l.b16 %v33
    %v67 = vunpack.c.l.b16 %v34
    %v68 = vunpack.c.l.b16 %v35
    %v69 = vunpack.c.l.b16 %v36
    %v70 = vpack.c.b16 %v67, %v66
    %v71 = vpack.c.b16 %v69, %v68
    %v76 = vunpack.c.l.b16 %v39
    %v77 = vunpack.c.l.b16 %v40
    %v78 = vunpack.c.l.b16 %v41
    %v79 = vunpack.c.l.b16 %v42
    %v80 = vpack.c.b16 %v77, %v76
    %v81 = vpack.c.b16 %v79, %v78
    %vm84 = vcmask 261120
    %v86 = vsel %vm84, %v70, 0
    %v89 = vsel %vm84, %v71, 0
    %91 = vmatprep.subr.bf16.mxu0 0
    %92 = vmatpush1.bf16.msra.mxu0 %v80
    %93 = vmatprep.subr.bf16.mxu0 0
    %94 = vmatpush1.bf16.msra.mxu0 %v81
    %95 = vmatprep.subr.bf16.mxu0 0
    %96 = vmatpush1.bf16.msra.mxu0 0
    %97 = vmatprep.subr.bf16.mxu0 0
    %98 = vmatpush1.bf16.msra.mxu0 0
    %99 = vmatprep.subr.bf16.mxu0 0
    %100 = vmatpush1.bf16.msra.mxu0 0
    %101 = vmatprep.subr.bf16.mxu0 0
    %102 = vmatpush1.bf16.msra.mxu0 0
    %103 = vmatprep.subr.bf16.mxu0 0
    %104 = vmatpush1.bf16.msra.mxu0 0
    %105 = vmatprep.subr.bf16.mxu0 0
    %106 = vmatpush1.bf16.msra.mxu0 0
    %107 = vmatprep.subr.bf16.mxu0 0
    %108 = vmatpush1.bf16.msra.mxu0 0
    %109 = vmatprep.subr.bf16.mxu0 0
    %110 = vmatpush1.bf16.msra.mxu0 0
    %111 = vmatprep.subr.bf16.mxu0 0
    %112 = vmatpush1.bf16.msra.mxu0 0
    %113 = vmatprep.subr.bf16.mxu0 0
    %114 = vmatpush1.bf16.msra.mxu0 0
    %115 = vmatprep.subr.bf16.mxu0 0
    %116 = vmatpush1.bf16.msra.mxu0 0
    %117 = vmatprep.subr.bf16.mxu0 0
    %118 = vmatpush1.bf16.msra.mxu0 0
    %119 = vmatprep.subr.bf16.mxu0 0
    %120 = vmatpush1.bf16.msra.mxu0 0
    %121 = vmatprep.subr.bf16.mxu0 0
    %122 = vmatpush1.bf16.msra.mxu0 0
    %123 = vmatprep.mubr.bf16.mxu0 0
    %124 = vmatmul.mubr.bf16.gmra.mrb[0].mxu0 %v86
    %v125 = vpop.f32.mrb[0].mxu0
    %v126 = vadd.f32 0.0, %v125
    %v127 = vpop.f32.mrb[0].mxu0
    %v128 = vpop.f32.mrb[0].mxu0
    %v129 = vadd.f32 0.0, %v128
    %v130 = vpop.f32.mrb[0].mxu0
    %131 = vmatprep.mubr.bf16.mxu0 0
    %132 = vmatmul.mubr.bf16.gmra.mrb[0].mxu0 %v89
    %v133 = vpop.f32.mrb[0].mxu0
    %v134 = vadd.f32 0.0, %v133
    %v135 = vpop.f32.mrb[0].mxu0
    %v136 = vpop.f32.mrb[0].mxu0
    %v137 = vadd.f32 0.0, %v136
    %v138 = vpop.f32.mrb[0].mxu0
    %139 = vdwg.mxu0
    %v140 = vpack.c.bf16 %v129, %v126
    %v141 = vpack.c.bf16 %v137, %v134
    %v142 = vld [vmem:[#allocation2] sm:$0xf]
    %v143 = vld [vmem:[#allocation2 + $0x4] sm:$0xf]
    %v144 = vld [vmem:[#allocation2 + $0x8] sm:$0xf]
    %v145 = vld [vmem:[#allocation2 + $0xc] sm:$0xf]
    %v146 = vld [vmem:[#allocation2 + $0x10] sm:$0xf]
    %v147 = vld [vmem:[#allocation2 + $0x14] sm:$0xf]
    %v148 = vld [vmem:[#allocation2 + $0x18] sm:$0xf]
    %v149 = vld [vmem:[#allocation2 + $0x1c] sm:$0xf]
    %v150 = vld [vmem:[#allocation2 + $0x20] sm:$0xf]
    %v151 = vld [vmem:[#allocation2 + $0x24] sm:$0xf]
    %v152 = vld [vmem:[#allocation2 + $0x28] sm:$0xf]
    %v153 = vld [vmem:[#allocation2 + $0x2c] sm:$0xf]
    %v154 = vld [vmem:[#allocation2 + $0x30] sm:$0xf]
    %v155 = vld [vmem:[#allocation2 + $0x34] sm:$0xf]
    %v156 = vld [vmem:[#allocation2 + $0x38] sm:$0xf]
    %v157 = vld [vmem:[#allocation2 + $0x3c] sm:$0xf]
    %v158 = vlaneseq
    %v159 = vshrl.u32 %v158, 7
    %v160 = vsub.s32 0, %v159
    %v161 = vrot.slane %v60, %v160
    %v178 = vunpack.c.l.b16 %v142
    %v179 = vunpack.c.l.b16 %v143
    %v180 = vunpack.c.l.b16 %v144
    %v181 = vunpack.c.l.b16 %v145
    %v182 = vunpack.c.l.b16 %v146
    %v183 = vunpack.c.l.b16 %v147
    %v184 = vunpack.c.l.b16 %v148
    %v185 = vunpack.c.l.b16 %v149
    %v186 = vunpack.c.l.b16 %v150
    %v187 = vunpack.c.l.b16 %v151
    %v188 = vunpack.c.l.b16 %v152
    %v189 = vunpack.c.l.b16 %v153
    %v190 = vunpack.c.l.b16 %v154
    %v191 = vunpack.c.l.b16 %v155
    %v192 = vunpack.c.l.b16 %v156
    %v193 = vunpack.c.l.b16 %v157
    %v194 = vpack.c.b16 %v179, %v178
    %v195 = vpack.c.b16 %v181, %v180
    %v196 = vpack.c.b16 %v183, %v182
    %v197 = vpack.c.b16 %v185, %v184
    %v198 = vpack.c.b16 %v187, %v186
    %v199 = vpack.c.b16 %v189, %v188
    %v200 = vpack.c.b16 %v191, %v190
    %v201 = vpack.c.b16 %v193, %v192
    %210 = vmatprep.subr.bf16.mxu0 0
    %211 = vmatpush1.bf16.msra.mxu0 %v194
    %212 = vmatprep.subr.bf16.mxu0 0
    %213 = vmatpush1.bf16.msra.mxu0 %v195
    %214 = vmatprep.subr.bf16.mxu0 0
    %215 = vmatpush1.bf16.msra.mxu0 %v196
    %216 = vmatprep.subr.bf16.mxu0 0
    %217 = vmatpush1.bf16.msra.mxu0 %v197
    %218 = vmatprep.subr.bf16.mxu0 0
    %219 = vmatpush1.bf16.msra.mxu0 %v198
    %220 = vmatprep.subr.bf16.mxu0 0
    %221 = vmatpush1.bf16.msra.mxu0 %v199
    %222 = vmatprep.subr.bf16.mxu0 0
    %223 = vmatpush1.bf16.msra.mxu0 %v200
    %224 = vmatprep.subr.bf16.mxu0 0
    %225 = vmatpush1.bf16.msra.mxu0 %v201
    %226 = vmatprep.subr.bf16.mxu0 0
    %227 = vmatpush1.bf16.msra.mxu0 0
    %228 = vmatprep.subr.bf16.mxu0 0
    %229 = vmatpush1.bf16.msra.mxu0 0
    %230 = vmatprep.subr.bf16.mxu0 0
    %231 = vmatpush1.bf16.msra.mxu0 0
    %232 = vmatprep.subr.bf16.mxu0 0
    %233 = vmatpush1.bf16.msra.mxu0 0
    %234 = vmatprep.subr.bf16.mxu0 0
    %235 = vmatpush1.bf16.msra.mxu0 0
    %236 = vmatprep.subr.bf16.mxu0 0
    %237 = vmatpush1.bf16.msra.mxu0 0
    %238 = vmatprep.subr.bf16.mxu0 0
    %239 = vmatpush1.bf16.msra.mxu0 0
    %240 = vmatprep.subr.bf16.mxu0 0
    %241 = vmatpush1.bf16.msra.mxu0 0
    %242 = vmatprep.mubr.bf16.mxu0 0
    %243 = vmatmul.mubr.bf16.gmra.mrb[0].mxu0 %v140
    %v244 = vpop.f32.mrb[0].mxu0
    %v245 = vadd.f32 %v161, %v244
    %v246 = vpop.f32.mrb[0].mxu0
    %v247 = vpop.f32.mrb[0].mxu0
    %v248 = vadd.f32 %v161, %v247
    %v249 = vpop.f32.mrb[0].mxu0
    %250 = vmatprep.mubr.bf16.mxu0 0
    %251 = vmatmul.mubr.bf16.gmra.mrb[0].mxu0 %v141
    %v252 = vpop.f32.mrb[0].mxu0
    %v253 = vadd.f32 %v161, %v252
    %v254 = vpop.f32.mrb[0].mxu0
    %v255 = vpop.f32.mrb[0].mxu0
    %v256 = vadd.f32 %v161, %v255
    %v257 = vpop.f32.mrb[0].mxu0
    %258 = vdwg.mxu0
    %v259 = vmul.f32 %v245, 0.01
    %v260 = vmul.f32 %v248, 0.01
    %v261 = vmul.f32 %v253, 0.01
    %v262 = vmul.f32 %v256, 0.01
    %v263 = vmax.f32 %v245, %v259
    %v264 = vmax.f32 %v248, %v260
    %v265 = vmax.f32 %v253, %v261
    %v266 = vmax.f32 %v256, %v262
    %v267 = vpack.c.bf16 %v264, %v263
    %v268 = vpack.c.bf16 %v266, %v265
    %s269 = scalar_lea.vmem [#allocation2], 64
    %v270 = vld [vmem:[%s269] sm:$0xf]
    %v271 = vld [vmem:[%s269 + $0x4] sm:$0xf]
    %v272 = vld [vmem:[%s269 + $0x8] sm:$0xf]
    %v273 = vld [vmem:[%s269 + $0xc] sm:$0xf]
    %v274 = vld [vmem:[%s269 + $0x10] sm:$0xf]
    %v275 = vld [vmem:[%s269 + $0x14] sm:$0xf]
    %v276 = vld [vmem:[%s269 + $0x18] sm:$0xf]
    %v277 = vld [vmem:[%s269 + $0x1c] sm:$0xf]
    %v278 = vld [vmem:[%s269 + $0x20] sm:$0xf]
    %v279 = vld [vmem:[%s269 + $0x24] sm:$0xf]
    %v280 = vld [vmem:[%s269 + $0x28] sm:$0xf]
    %v281 = vld [vmem:[%s269 + $0x2c] sm:$0xf]
    %v282 = vld [vmem:[%s269 + $0x30] sm:$0xf]
    %v283 = vld [vmem:[%s269 + $0x34] sm:$0xf]
    %v284 = vld [vmem:[%s269 + $0x38] sm:$0xf]
    %v285 = vld [vmem:[%s269 + $0x3c] sm:$0xf]
    %v286 = vlaneseq
    %v287 = vshrl.u32 %v286, 7
    %v288 = vsub.s32 1, %v287
    %v289 = vrot.slane %v60, %v288
    %v306 = vunpack.c.l.b16 %v270
    %v307 = vunpack.c.l.b16 %v271
    %v308 = vunpack.c.l.b16 %v272
    %v309 = vunpack.c.l.b16 %v273
    %v310 = vunpack.c.l.b16 %v274
    %v311 = vunpack.c.l.b16 %v275
    %v312 = vunpack.c.l.b16 %v276
    %v313 = vunpack.c.l.b16 %v277
    %v314 = vunpack.c.l.b16 %v278
    %v315 = vunpack.c.l.b16 %v279
    %v316 = vunpack.c.l.b16 %v280
    %v317 = vunpack.c.l.b16 %v281
    %v318 = vunpack.c.l.b16 %v282
    %v319 = vunpack.c.l.b16 %v283
    %v320 = vunpack.c.l.b16 %v284
    %v321 = vunpack.c.l.b16 %v285
    %v322 = vpack.c.b16 %v307, %v306
    %v323 = vpack.c.b16 %v309, %v308
    %v324 = vpack.c.b16 %v311, %v310
    %v325 = vpack.c.b16 %v313, %v312
    %v326 = vpack.c.b16 %v315, %v314
    %v327 = vpack.c.b16 %v317, %v316
    %v328 = vpack.c.b16 %v319, %v318
    %v329 = vpack.c.b16 %v321, %v320
    %338 = vmatprep.subr.bf16.mxu0 0
    %339 = vmatpush1.bf16.msra.mxu0 %v322
    %340 = vmatprep.subr.bf16.mxu0 0
    %341 = vmatpush1.bf16.msra.mxu0 %v323
    %342 = vmatprep.subr.bf16.mxu0 0
    %343 = vmatpush1.bf16.msra.mxu0 %v324
    %344 = vmatprep.subr.bf16.mxu0 0
    %345 = vmatpush1.bf16.msra.mxu0 %v325
    %346 = vmatprep.subr.bf16.mxu0 0
    %347 = vmatpush1.bf16.msra.mxu0 %v326
    %348 = vmatprep.subr.bf16.mxu0 0
    %349 = vmatpush1.bf16.msra.mxu0 %v327
    %350 = vmatprep.subr.bf16.mxu0 0
    %351 = vmatpush1.bf16.msra.mxu0 %v328
    %352 = vmatprep.subr.bf16.mxu0 0
    %353 = vmatpush1.bf16.msra.mxu0 %v329
    %354 = vmatprep.subr.bf16.mxu0 0
    %355 = vmatpush1.bf16.msra.mxu0 0
    %356 = vmatprep.subr.bf16.mxu0 0
    %357 = vmatpush1.bf16.msra.mxu0 0
    %358 = vmatprep.subr.bf16.mxu0 0
    %359 = vmatpush1.bf16.msra.mxu0 0
    %360 = vmatprep.subr.bf16.mxu0 0
    %361 = vmatpush1.bf16.msra.mxu0 0
    %362 = vmatprep.subr.bf16.mxu0 0
    %363 = vmatpush1.bf16.msra.mxu0 0
    %364 = vmatprep.subr.bf16.mxu0 0
    %365 = vmatpush1.bf16.msra.mxu0 0
    %366 = vmatprep.subr.bf16.mxu0 0
    %367 = vmatpush1.bf16.msra.mxu0 0
    %368 = vmatprep.subr.bf16.mxu0 0
    %369 = vmatpush1.bf16.msra.mxu0 0
    %370 = vmatprep.mubr.bf16.mxu0 0
    %371 = vmatmul.mubr.bf16.gmra.mrb[0].mxu0 %v267
    %v372 = vpop.f32.mrb[0].mxu0
    %v373 = vadd.f32 %v289, %v372
    %v374 = vpop.f32.mrb[0].mxu0
    %v375 = vpop.f32.mrb[0].mxu0
    %v376 = vadd.f32 %v289, %v375
    %v377 = vpop.f32.mrb[0].mxu0
    %378 = vmatprep.mubr.bf16.mxu0 0
    %379 = vmatmul.mubr.bf16.gmra.mrb[0].mxu0 %v268
    %v380 = vpop.f32.mrb[0].mxu0
    %v381 = vadd.f32 %v289, %v380
    %v382 = vpop.f32.mrb[0].mxu0
    %v383 = vpop.f32.mrb[0].mxu0
    %v384 = vadd.f32 %v289, %v383
    %v385 = vpop.f32.mrb[0].mxu0
    %386 = vdwg.mxu0
    %v387 = vmul.f32 %v373, 0.01
    %v388 = vmul.f32 %v376, 0.01
    %v389 = vmul.f32 %v381, 0.01
    %v390 = vmul.f32 %v384, 0.01
    %v391 = vmax.f32 %v373, %v387
    %v392 = vmax.f32 %v376, %v388
    %v393 = vmax.f32 %v381, %v389
    %v394 = vmax.f32 %v384, %v390
    %v395 = vmul.f32 %v391, %v56
    %v396 = vmul.f32 %v392, %v57
    %v397 = vmul.f32 %v393, %v58
    %v398 = vmul.f32 %v394, %v59
    %v399 = vadd.f32 %v395, %v396
    %v400 = vadd.f32 %v399, %v397
    %v401 = vadd.f32 %v400, %v398
    %v402 = vrot.slane %v401, 4
    %v403 = vadd.f32 %v401, %v402
    %v404 = vrot.slane %v403, 2
    %v405 = vadd.f32 %v403, %v404
    %v406 = vrot.slane %v405, 1
    %v407 = vadd.f32 %v405, %v406
    %v408 = vmul.f32 %v407, 0.0625
    %v409 = vsub.f32 %v391, %v408
    %v410 = vsub.f32 %v392, %v408
    %v411 = vsub.f32 %v393, %v408
    %v412 = vsub.f32 %v394, %v408
    %v413 = vmul.f32 %v409, %v409
    %v414 = vmul.f32 %v410, %v410
    %v415 = vmul.f32 %v411, %v411
    %v416 = vmul.f32 %v412, %v412
    %v417 = vmul.f32 %v413, %v56
    %v418 = vmul.f32 %v414, %v57
    %v419 = vmul.f32 %v415, %v58
    %v420 = vmul.f32 %v416, %v59
    %v421 = vadd.f32 %v417, %v418
    %v422 = vadd.f32 %v421, %v419
    %v423 = vadd.f32 %v422, %v420
    %v424 = vrot.slane %v423, 4
    %v425 = vadd.f32 %v423, %v424
    %v426 = vrot.slane %v425, 2
    %v427 = vadd.f32 %v425, %v426
    %v428 = vrot.slane %v427, 1
    %v429 = vadd.f32 %v427, %v428
    %v430 = vmul.f32 %v429, 0.0625
    %v431 = vadd.f32 %v430, 1e-05
    %v432 = vrsqrt.pop %v431
    %v433 = vmul.f32 %v432, %v60
    %v434 = vlaneseq
    %v435 = vshrl.u32 %v434, 7
    %v436 = vsub.s32 2, %v435
    %v437 = vrot.slane %v433, %v436
    %v438 = vmul.f32 %v409, %v437
    %v439 = vmul.f32 %v410, %v437
    %v440 = vmul.f32 %v411, %v437
    %v441 = vmul.f32 %v412, %v437
    %v442 = vlaneseq
    %v443 = vshrl.u32 %v442, 7
    %v444 = vsub.s32 3, %v443
    %v445 = vrot.slane %v60, %v444
    %v446 = vadd.f32 %v438, %v445
    %v447 = vadd.f32 %v439, %v445
    %v448 = vadd.f32 %v440, %v445
    %v449 = vadd.f32 %v441, %v445
    %v450 = vpack.c.bf16 %v447, %v446
    %v451 = vpack.c.bf16 %v449, %v448
    %452 = vmatprep.subr.bf16.mxu0 0
    %453 = vmatpush1.bf16.msra.mxu0 %v450
    %454 = vmatprep.subr.bf16.mxu0 0
    %455 = vmatpush1.bf16.msra.mxu0 %v451
    %456 = vmatprep.subr.bf16.mxu0 0
    %457 = vmatpush1.bf16.msra.mxu0 0
    %458 = vmatprep.subr.bf16.mxu0 0
    %459 = vmatpush1.bf16.msra.mxu0 0
    %460 = vmatprep.subr.bf16.mxu0 0
    %461 = vmatpush1.bf16.msra.mxu0 0
    %462 = vmatprep.subr.bf16.mxu0 0
    %463 = vmatpush1.bf16.msra.mxu0 0
    %464 = vmatprep.subr.bf16.mxu0 0
    %465 = vmatpush1.bf16.msra.mxu0 0
    %466 = vmatprep.subr.bf16.mxu0 0
    %467 = vmatpush1.bf16.msra.mxu0 0
    %468 = vmatprep.subr.bf16.mxu0 0
    %469 = vmatpush1.bf16.msra.mxu0 0
    %470 = vmatprep.subr.bf16.mxu0 0
    %471 = vmatpush1.bf16.msra.mxu0 0
    %472 = vmatprep.subr.bf16.mxu0 0
    %473 = vmatpush1.bf16.msra.mxu0 0
    %474 = vmatprep.subr.bf16.mxu0 0
    %475 = vmatpush1.bf16.msra.mxu0 0
    %476 = vmatprep.subr.bf16.mxu0 0
    %477 = vmatpush1.bf16.msra.mxu0 0
    %478 = vmatprep.subr.bf16.mxu0 0
    %479 = vmatpush1.bf16.msra.mxu0 0
    %480 = vmatprep.subr.bf16.mxu0 0
    %481 = vmatpush1.bf16.msra.mxu0 0
    %482 = vmatprep.subr.bf16.mxu0 0
    %483 = vmatpush1.bf16.msra.mxu0 0
    %484 = vmatprep.mubr.bf16.mxu0 0
    %485 = vmatmul.mubr.bf16.gmra.mrb[0].mxu0 %v86
    %v486 = vpop.f32.mrb[0].mxu0
    %v487 = vadd.f32 0.0, %v486
    %v488 = vpop.f32.mrb[0].mxu0
    %v489 = vpop.f32.mrb[0].mxu0
    %v490 = vadd.f32 0.0, %v489
    %v491 = vpop.f32.mrb[0].mxu0
    %492 = vmatprep.mubr.bf16.mxu0 0
    %493 = vmatmul.mubr.bf16.gmra.mrb[0].mxu0 %v89
    %v494 = vpop.f32.mrb[0].mxu0
    %v495 = vadd.f32 0.0, %v494
    %v496 = vpop.f32.mrb[0].mxu0
    %v497 = vpop.f32.mrb[0].mxu0
    %v498 = vadd.f32 0.0, %v497
    %v499 = vpop.f32.mrb[0].mxu0
    %500 = vdwg.mxu0
    %v501 = vpack.c.bf16 %v490, %v487
    %v502 = vpack.c.bf16 %v498, %v495
    %s503 = scalar_lea.vmem [#allocation2], 128
    %v504 = vld [vmem:[%s503] sm:$0xf]
    %v505 = vld [vmem:[%s503 + $0x4] sm:$0xf]
    %v506 = vld [vmem:[%s503 + $0x8] sm:$0xf]
    %v507 = vld [vmem:[%s503 + $0xc] sm:$0xf]
    %v508 = vld [vmem:[%s503 + $0x10] sm:$0xf]
    %v509 = vld [vmem:[%s503 + $0x14] sm:$0xf]
    %v510 = vld [vmem:[%s503 + $0x18] sm:$0xf]
    %v511 = vld [vmem:[%s503 + $0x1c] sm:$0xf]
    %v512 = vld [vmem:[%s503 + $0x20] sm:$0xf]
    %v513 = vld [vmem:[%s503 + $0x24] sm:$0xf]
    %v514 = vld [vmem:[%s503 + $0x28] sm:$0xf]
    %v515 = vld [vmem:[%s503 + $0x2c] sm:$0xf]
    %v516 = vld [vmem:[%s503 + $0x30] sm:$0xf]
    %v517 = vld [vmem:[%s503 + $0x34] sm:$0xf]
    %v518 = vld [vmem:[%s503 + $0x38] sm:$0xf]
    %v519 = vld [vmem:[%s503 + $0x3c] sm:$0xf]
    %v520 = vlaneseq
    %v521 = vshrl.u32 %v520, 7
    %v522 = vsub.s32 4, %v521
    %v523 = vrot.slane %v60, %v522
    %v540 = vunpack.c.l.b16 %v504
    %v541 = vunpack.c.l.b16 %v505
    %v542 = vunpack.c.l.b16 %v506
    %v543 = vunpack.c.l.b16 %v507
    %v544 = vunpack.c.l.b16 %v508
    %v545 = vunpack.c.l.b16 %v509
    %v546 = vunpack.c.l.b16 %v510
    %v547 = vunpack.c.l.b16 %v511
    %v548 = vunpack.c.l.b16 %v512
    %v549 = vunpack.c.l.b16 %v513
    %v550 = vunpack.c.l.b16 %v514
    %v551 = vunpack.c.l.b16 %v515
    %v552 = vunpack.c.l.b16 %v516
    %v553 = vunpack.c.l.b16 %v517
    %v554 = vunpack.c.l.b16 %v518
    %v555 = vunpack.c.l.b16 %v519
    %v556 = vpack.c.b16 %v541, %v540
    %v557 = vpack.c.b16 %v543, %v542
    %v558 = vpack.c.b16 %v545, %v544
    %v559 = vpack.c.b16 %v547, %v546
    %v560 = vpack.c.b16 %v549, %v548
    %v561 = vpack.c.b16 %v551, %v550
    %v562 = vpack.c.b16 %v553, %v552
    %v563 = vpack.c.b16 %v555, %v554
    %572 = vmatprep.subr.bf16.mxu0 0
    %573 = vmatpush1.bf16.msra.mxu0 %v556
    %574 = vmatprep.subr.bf16.mxu0 0
    %575 = vmatpush1.bf16.msra.mxu0 %v557
    %576 = vmatprep.subr.bf16.mxu0 0
    %577 = vmatpush1.bf16.msra.mxu0 %v558
    %578 = vmatprep.subr.bf16.mxu0 0
    %579 = vmatpush1.bf16.msra.mxu0 %v559
    %580 = vmatprep.subr.bf16.mxu0 0
    %581 = vmatpush1.bf16.msra.mxu0 %v560
    %582 = vmatprep.subr.bf16.mxu0 0
    %583 = vmatpush1.bf16.msra.mxu0 %v561
    %584 = vmatprep.subr.bf16.mxu0 0
    %585 = vmatpush1.bf16.msra.mxu0 %v562
    %586 = vmatprep.subr.bf16.mxu0 0
    %587 = vmatpush1.bf16.msra.mxu0 %v563
    %588 = vmatprep.subr.bf16.mxu0 0
    %589 = vmatpush1.bf16.msra.mxu0 0
    %590 = vmatprep.subr.bf16.mxu0 0
    %591 = vmatpush1.bf16.msra.mxu0 0
    %592 = vmatprep.subr.bf16.mxu0 0
    %593 = vmatpush1.bf16.msra.mxu0 0
    %594 = vmatprep.subr.bf16.mxu0 0
    %595 = vmatpush1.bf16.msra.mxu0 0
    %596 = vmatprep.subr.bf16.mxu0 0
    %597 = vmatpush1.bf16.msra.mxu0 0
    %598 = vmatprep.subr.bf16.mxu0 0
    %599 = vmatpush1.bf16.msra.mxu0 0
    %600 = vmatprep.subr.bf16.mxu0 0
    %601 = vmatpush1.bf16.msra.mxu0 0
    %602 = vmatprep.subr.bf16.mxu0 0
    %603 = vmatpush1.bf16.msra.mxu0 0
    %604 = vmatprep.mubr.bf16.mxu0 0
    %605 = vmatmul.mubr.bf16.gmra.mrb[0].mxu0 %v501
    %v606 = vpop.f32.mrb[0].mxu0
    %v607 = vadd.f32 %v523, %v606
    %v608 = vpop.f32.mrb[0].mxu0
    %v609 = vpop.f32.mrb[0].mxu0
    %v610 = vadd.f32 %v523, %v609
    %v611 = vpop.f32.mrb[0].mxu0
    %612 = vmatprep.mubr.bf16.mxu0 0
    %613 = vmatmul.mubr.bf16.gmra.mrb[0].mxu0 %v502
    %v614 = vpop.f32.mrb[0].mxu0
    %v615 = vadd.f32 %v523, %v614
    %v616 = vpop.f32.mrb[0].mxu0
    %v617 = vpop.f32.mrb[0].mxu0
    %v618 = vadd.f32 %v523, %v617
    %v619 = vpop.f32.mrb[0].mxu0
    %620 = vdwg.mxu0
    %v621 = vmul.f32 %v607, 0.01
    %v622 = vmul.f32 %v610, 0.01
    %v623 = vmul.f32 %v615, 0.01
    %v624 = vmul.f32 %v618, 0.01
    %v625 = vmax.f32 %v607, %v621
    %v626 = vmax.f32 %v610, %v622
    %v627 = vmax.f32 %v615, %v623
    %v628 = vmax.f32 %v618, %v624
    %v629 = vpack.c.bf16 %v626, %v625
    %v630 = vpack.c.bf16 %v628, %v627
    %s631 = scalar_lea.vmem [#allocation2], 192
    %v632 = vld [vmem:[%s631] sm:$0xf]
    %v633 = vld [vmem:[%s631 + $0x4] sm:$0xf]
    %v634 = vld [vmem:[%s631 + $0x8] sm:$0xf]
    %v635 = vld [vmem:[%s631 + $0xc] sm:$0xf]
    %v636 = vld [vmem:[%s631 + $0x10] sm:$0xf]
    %v637 = vld [vmem:[%s631 + $0x14] sm:$0xf]
    %v638 = vld [vmem:[%s631 + $0x18] sm:$0xf]
    %v639 = vld [vmem:[%s631 + $0x1c] sm:$0xf]
    %v640 = vld [vmem:[%s631 + $0x20] sm:$0xf]
    %v641 = vld [vmem:[%s631 + $0x24] sm:$0xf]
    %v642 = vld [vmem:[%s631 + $0x28] sm:$0xf]
    %v643 = vld [vmem:[%s631 + $0x2c] sm:$0xf]
    %v644 = vld [vmem:[%s631 + $0x30] sm:$0xf]
    %v645 = vld [vmem:[%s631 + $0x34] sm:$0xf]
    %v646 = vld [vmem:[%s631 + $0x38] sm:$0xf]
    %v647 = vld [vmem:[%s631 + $0x3c] sm:$0xf]
    %v648 = vlaneseq
    %v649 = vshrl.u32 %v648, 7
    %v650 = vsub.s32 5, %v649
    %v651 = vrot.slane %v60, %v650
    %v668 = vunpack.c.l.b16 %v632
    %v669 = vunpack.c.l.b16 %v633
    %v670 = vunpack.c.l.b16 %v634
    %v671 = vunpack.c.l.b16 %v635
    %v672 = vunpack.c.l.b16 %v636
    %v673 = vunpack.c.l.b16 %v637
    %v674 = vunpack.c.l.b16 %v638
    %v675 = vunpack.c.l.b16 %v639
    %v676 = vunpack.c.l.b16 %v640
    %v677 = vunpack.c.l.b16 %v641
    %v678 = vunpack.c.l.b16 %v642
    %v679 = vunpack.c.l.b16 %v643
    %v680 = vunpack.c.l.b16 %v644
    %v681 = vunpack.c.l.b16 %v645
    %v682 = vunpack.c.l.b16 %v646
    %v683 = vunpack.c.l.b16 %v647
    %v684 = vpack.c.b16 %v669, %v668
    %v685 = vpack.c.b16 %v671, %v670
    %v686 = vpack.c.b16 %v673, %v672
    %v687 = vpack.c.b16 %v675, %v674
    %v688 = vpack.c.b16 %v677, %v676
    %v689 = vpack.c.b16 %v679, %v678
    %v690 = vpack.c.b16 %v681, %v680
    %v691 = vpack.c.b16 %v683, %v682
    %700 = vmatprep.subr.bf16.mxu0 0
    %701 = vmatpush1.bf16.msra.mxu0 %v684
    %702 = vmatprep.subr.bf16.mxu0 0
    %703 = vmatpush1.bf16.msra.mxu0 %v685
    %704 = vmatprep.subr.bf16.mxu0 0
    %705 = vmatpush1.bf16.msra.mxu0 %v686
    %706 = vmatprep.subr.bf16.mxu0 0
    %707 = vmatpush1.bf16.msra.mxu0 %v687
    %708 = vmatprep.subr.bf16.mxu0 0
    %709 = vmatpush1.bf16.msra.mxu0 %v688
    %710 = vmatprep.subr.bf16.mxu0 0
    %711 = vmatpush1.bf16.msra.mxu0 %v689
    %712 = vmatprep.subr.bf16.mxu0 0
    %713 = vmatpush1.bf16.msra.mxu0 %v690
    %714 = vmatprep.subr.bf16.mxu0 0
    %715 = vmatpush1.bf16.msra.mxu0 %v691
    %716 = vmatprep.subr.bf16.mxu0 0
    %717 = vmatpush1.bf16.msra.mxu0 0
    %718 = vmatprep.subr.bf16.mxu0 0
    %719 = vmatpush1.bf16.msra.mxu0 0
    %720 = vmatprep.subr.bf16.mxu0 0
    %721 = vmatpush1.bf16.msra.mxu0 0
    %722 = vmatprep.subr.bf16.mxu0 0
    %723 = vmatpush1.bf16.msra.mxu0 0
    %724 = vmatprep.subr.bf16.mxu0 0
    %725 = vmatpush1.bf16.msra.mxu0 0
    %726 = vmatprep.subr.bf16.mxu0 0
    %727 = vmatpush1.bf16.msra.mxu0 0
    %728 = vmatprep.subr.bf16.mxu0 0
    %729 = vmatpush1.bf16.msra.mxu0 0
    %730 = vmatprep.subr.bf16.mxu0 0
    %731 = vmatpush1.bf16.msra.mxu0 0
    %732 = vmatprep.mubr.bf16.mxu0 0
    %733 = vmatmul.mubr.bf16.gmra.mrb[0].mxu0 %v629
    %v734 = vpop.f32.mrb[0].mxu0
    %v735 = vadd.f32 %v651, %v734
    %v736 = vpop.f32.mrb[0].mxu0
    %v737 = vpop.f32.mrb[0].mxu0
    %v738 = vadd.f32 %v651, %v737
    %v739 = vpop.f32.mrb[0].mxu0
    %740 = vmatprep.mubr.bf16.mxu0 0
    %741 = vmatmul.mubr.bf16.gmra.mrb[0].mxu0 %v630
    %v742 = vpop.f32.mrb[0].mxu0
    %v743 = vadd.f32 %v651, %v742
    %v744 = vpop.f32.mrb[0].mxu0
    %v745 = vpop.f32.mrb[0].mxu0
    %v746 = vadd.f32 %v651, %v745
    %v747 = vpop.f32.mrb[0].mxu0
    %748 = vdwg.mxu0
    %v749 = vmul.f32 %v735, 0.01
    %v750 = vmul.f32 %v738, 0.01
    %v751 = vmul.f32 %v743, 0.01
    %v752 = vmul.f32 %v746, 0.01
    %v753 = vmax.f32 %v735, %v749
    %v754 = vmax.f32 %v738, %v750
    %v755 = vmax.f32 %v743, %v751
    %v756 = vmax.f32 %v746, %v752
    %v757 = vmul.f32 %v753, %v56
    %v758 = vmul.f32 %v754, %v57
    %v759 = vmul.f32 %v755, %v58
    %v760 = vmul.f32 %v756, %v59
    %v761 = vadd.f32 %v757, %v758
    %v762 = vadd.f32 %v761, %v759
    %v763 = vadd.f32 %v762, %v760
    %v764 = vrot.slane %v763, 4
    %v765 = vadd.f32 %v763, %v764
    %v766 = vrot.slane %v765, 2
    %v767 = vadd.f32 %v765, %v766
    %v768 = vrot.slane %v767, 1
    %v769 = vadd.f32 %v767, %v768
    %v770 = vmul.f32 %v769, 0.0625
    %v771 = vsub.f32 %v753, %v770
    %v772 = vsub.f32 %v754, %v770
    %v773 = vsub.f32 %v755, %v770
    %v774 = vsub.f32 %v756, %v770
    %v775 = vmul.f32 %v771, %v771
    %v776 = vmul.f32 %v772, %v772
    %v777 = vmul.f32 %v773, %v773
    %v778 = vmul.f32 %v774, %v774
    %v779 = vmul.f32 %v775, %v56
    %v780 = vmul.f32 %v776, %v57
    %v781 = vmul.f32 %v777, %v58
    %v782 = vmul.f32 %v778, %v59
    %v783 = vadd.f32 %v779, %v780
    %v784 = vadd.f32 %v783, %v781
    %v785 = vadd.f32 %v784, %v782
    %v786 = vrot.slane %v785, 4
    %v787 = vadd.f32 %v785, %v786
    %v788 = vrot.slane %v787, 2
    %v789 = vadd.f32 %v787, %v788
    %v790 = vrot.slane %v789, 1
    %v791 = vadd.f32 %v789, %v790
    %v792 = vmul.f32 %v791, 0.0625
    %v793 = vadd.f32 %v792, 1e-05
    %v794 = vrsqrt.pop %v793
    %v795 = vmul.f32 %v794, %v60
    %v796 = vlaneseq
    %v797 = vshrl.u32 %v796, 7
    %v798 = vsub.s32 6, %v797
    %v799 = vrot.slane %v795, %v798
    %v800 = vmul.f32 %v771, %v799
    %v801 = vmul.f32 %v772, %v799
    %v802 = vmul.f32 %v773, %v799
    %v803 = vmul.f32 %v774, %v799
    %v804 = vlaneseq
    %v805 = vshrl.u32 %v804, 7
    %v806 = vsub.s32 7, %v805
    %v807 = vrot.slane %v60, %v806
    %v808 = vadd.f32 %v800, %v807
    %v809 = vadd.f32 %v801, %v807
    %v810 = vadd.f32 %v802, %v807
    %v811 = vadd.f32 %v803, %v807
    %v812 = vpack.c.bf16 %v809, %v808
    %v813 = vpack.c.bf16 %v811, %v810
    %v816 = vunpack.c.l.b16 %v37
    %v817 = vunpack.c.l.b16 %v38
    %v818 = vpack.c.b16 %v817, %v816
    %v820 = vsel %vm84, %v818, 0
    %822 = vmatprep.subr.bf16.mxu0 0
    %823 = vmatpush1.bf16.msra.mxu0 %v812
    %824 = vmatprep.subr.bf16.mxu0 0
    %825 = vmatpush1.bf16.msra.mxu0 %v813
    %826 = vmatprep.subr.bf16.mxu0 0
    %827 = vmatpush1.bf16.msra.mxu0 0
    %828 = vmatprep.subr.bf16.mxu0 0
    %829 = vmatpush1.bf16.msra.mxu0 0
    %830 = vmatprep.subr.bf16.mxu0 0
    %831 = vmatpush1.bf16.msra.mxu0 0
    %832 = vmatprep.subr.bf16.mxu0 0
    %833 = vmatpush1.bf16.msra.mxu0 0
    %834 = vmatprep.subr.bf16.mxu0 0
    %835 = vmatpush1.bf16.msra.mxu0 0
    %836 = vmatprep.subr.bf16.mxu0 0
    %837 = vmatpush1.bf16.msra.mxu0 0
    %838 = vmatprep.subr.bf16.mxu0 0
    %839 = vmatpush1.bf16.msra.mxu0 0
    %840 = vmatprep.subr.bf16.mxu0 0
    %841 = vmatpush1.bf16.msra.mxu0 0
    %842 = vmatprep.subr.bf16.mxu0 0
    %843 = vmatpush1.bf16.msra.mxu0 0
    %844 = vmatprep.subr.bf16.mxu0 0
    %845 = vmatpush1.bf16.msra.mxu0 0
    %846 = vmatprep.subr.bf16.mxu0 0
    %847 = vmatpush1.bf16.msra.mxu0 0
    %848 = vmatprep.subr.bf16.mxu0 0
    %849 = vmatpush1.bf16.msra.mxu0 0
    %850 = vmatprep.subr.bf16.mxu0 0
    %851 = vmatpush1.bf16.msra.mxu0 0
    %852 = vmatprep.subr.bf16.mxu0 0
    %853 = vmatpush1.bf16.msra.mxu0 0
    %854 = vmatprep.mubr.bf16.mxu0 0
    %855 = vmatmul.mubr.bf16.gmra.mrb[0].mxu0 %v820
    %v856 = vpop.f32.mrb[0].mxu0
    %v857 = vadd.f32 0.0, %v856
    %v858 = vpop.f32.mrb[0].mxu0
    %v859 = vpop.f32.mrb[0].mxu0
    %v860 = vadd.f32 0.0, %v859
    %v861 = vpop.f32.mrb[0].mxu0
    %862 = vdwg.mxu0
    %v863 = vpack.c.bf16 %v860, %v857
    %s864 = scalar_lea.vmem [#allocation2], 256
    %v865 = vld [vmem:[%s864] sm:$0xf]
    %v866 = vld [vmem:[%s864 + $0x4] sm:$0xf]
    %v867 = vld [vmem:[%s864 + $0x8] sm:$0xf]
    %v868 = vld [vmem:[%s864 + $0xc] sm:$0xf]
    %v869 = vld [vmem:[%s864 + $0x10] sm:$0xf]
    %v870 = vld [vmem:[%s864 + $0x14] sm:$0xf]
    %v871 = vld [vmem:[%s864 + $0x18] sm:$0xf]
    %v872 = vld [vmem:[%s864 + $0x1c] sm:$0xf]
    %v873 = vld [vmem:[%s864 + $0x20] sm:$0xf]
    %v874 = vld [vmem:[%s864 + $0x24] sm:$0xf]
    %v875 = vld [vmem:[%s864 + $0x28] sm:$0xf]
    %v876 = vld [vmem:[%s864 + $0x2c] sm:$0xf]
    %v877 = vld [vmem:[%s864 + $0x30] sm:$0xf]
    %v878 = vld [vmem:[%s864 + $0x34] sm:$0xf]
    %v879 = vld [vmem:[%s864 + $0x38] sm:$0xf]
    %v880 = vld [vmem:[%s864 + $0x3c] sm:$0xf]
    %v881 = vlaneseq
    %v882 = vshrl.u32 %v881, 7
    %v883 = vsub.s32 0, %v882
    %v884 = vrot.slane %v61, %v883
    %v901 = vunpack.c.l.b16 %v865
    %v902 = vunpack.c.l.b16 %v866
    %v903 = vunpack.c.l.b16 %v867
    %v904 = vunpack.c.l.b16 %v868
    %v905 = vunpack.c.l.b16 %v869
    %v906 = vunpack.c.l.b16 %v870
    %v907 = vunpack.c.l.b16 %v871
    %v908 = vunpack.c.l.b16 %v872
    %v909 = vunpack.c.l.b16 %v873
    %v910 = vunpack.c.l.b16 %v874
    %v911 = vunpack.c.l.b16 %v875
    %v912 = vunpack.c.l.b16 %v876
    %v913 = vunpack.c.l.b16 %v877
    %v914 = vunpack.c.l.b16 %v878
    %v915 = vunpack.c.l.b16 %v879
    %v916 = vunpack.c.l.b16 %v880
    %v917 = vpack.c.b16 %v902, %v901
    %v918 = vpack.c.b16 %v904, %v903
    %v919 = vpack.c.b16 %v906, %v905
    %v920 = vpack.c.b16 %v908, %v907
    %v921 = vpack.c.b16 %v910, %v909
    %v922 = vpack.c.b16 %v912, %v911
    %v923 = vpack.c.b16 %v914, %v913
    %v924 = vpack.c.b16 %v916, %v915
    %933 = vmatprep.subr.bf16.mxu0 0
    %934 = vmatpush1.bf16.msra.mxu0 %v917
    %935 = vmatprep.subr.bf16.mxu0 0
    %936 = vmatpush1.bf16.msra.mxu0 %v918
    %937 = vmatprep.subr.bf16.mxu0 0
    %938 = vmatpush1.bf16.msra.mxu0 %v919
    %939 = vmatprep.subr.bf16.mxu0 0
    %940 = vmatpush1.bf16.msra.mxu0 %v920
    %941 = vmatprep.subr.bf16.mxu0 0
    %942 = vmatpush1.bf16.msra.mxu0 %v921
    %943 = vmatprep.subr.bf16.mxu0 0
    %944 = vmatpush1.bf16.msra.mxu0 %v922
    %945 = vmatprep.subr.bf16.mxu0 0
    %946 = vmatpush1.bf16.msra.mxu0 %v923
    %947 = vmatprep.subr.bf16.mxu0 0
    %948 = vmatpush1.bf16.msra.mxu0 %v924
    %949 = vmatprep.subr.bf16.mxu0 0
    %950 = vmatpush1.bf16.msra.mxu0 0
    %951 = vmatprep.subr.bf16.mxu0 0
    %952 = vmatpush1.bf16.msra.mxu0 0
    %953 = vmatprep.subr.bf16.mxu0 0
    %954 = vmatpush1.bf16.msra.mxu0 0
    %955 = vmatprep.subr.bf16.mxu0 0
    %956 = vmatpush1.bf16.msra.mxu0 0
    %957 = vmatprep.subr.bf16.mxu0 0
    %958 = vmatpush1.bf16.msra.mxu0 0
    %959 = vmatprep.subr.bf16.mxu0 0
    %960 = vmatpush1.bf16.msra.mxu0 0
    %961 = vmatprep.subr.bf16.mxu0 0
    %962 = vmatpush1.bf16.msra.mxu0 0
    %963 = vmatprep.subr.bf16.mxu0 0
    %964 = vmatpush1.bf16.msra.mxu0 0
    %965 = vmatprep.mubr.bf16.mxu0 0
    %966 = vmatmul.mubr.bf16.gmra.mrb[0].mxu0 %v863
    %v967 = vpop.f32.mrb[0].mxu0
    %v968 = vadd.f32 %v884, %v967
    %v969 = vpop.f32.mrb[0].mxu0
    %v970 = vpop.f32.mrb[0].mxu0
    %v971 = vadd.f32 %v884, %v970
    %v972 = vpop.f32.mrb[0].mxu0
    %973 = vdwg.mxu0
    %v974 = vmul.f32 %v968, 0.01
    %v975 = vmul.f32 %v971, 0.01
    %v976 = vmax.f32 %v968, %v974
    %v977 = vmax.f32 %v971, %v975
    %v978 = vpack.c.bf16 %v977, %v976
    %s979 = scalar_lea.vmem [#allocation2], 320
    %v980 = vld [vmem:[%s979] sm:$0xf]
    %v981 = vld [vmem:[%s979 + $0x4] sm:$0xf]
    %v982 = vld [vmem:[%s979 + $0x8] sm:$0xf]
    %v983 = vld [vmem:[%s979 + $0xc] sm:$0xf]
    %v984 = vld [vmem:[%s979 + $0x10] sm:$0xf]
    %v985 = vld [vmem:[%s979 + $0x14] sm:$0xf]
    %v986 = vld [vmem:[%s979 + $0x18] sm:$0xf]
    %v987 = vld [vmem:[%s979 + $0x1c] sm:$0xf]
    %v988 = vld [vmem:[%s979 + $0x20] sm:$0xf]
    %v989 = vld [vmem:[%s979 + $0x24] sm:$0xf]
    %v990 = vld [vmem:[%s979 + $0x28] sm:$0xf]
    %v991 = vld [vmem:[%s979 + $0x2c] sm:$0xf]
    %v992 = vld [vmem:[%s979 + $0x30] sm:$0xf]
    %v993 = vld [vmem:[%s979 + $0x34] sm:$0xf]
    %v994 = vld [vmem:[%s979 + $0x38] sm:$0xf]
    %v995 = vld [vmem:[%s979 + $0x3c] sm:$0xf]
    %v996 = vlaneseq
    %v997 = vshrl.u32 %v996, 7
    %v998 = vsub.s32 1, %v997
    %v999 = vrot.slane %v61, %v998
    %v1016 = vunpack.c.l.b16 %v980
    %v1017 = vunpack.c.l.b16 %v981
    %v1018 = vunpack.c.l.b16 %v982
    %v1019 = vunpack.c.l.b16 %v983
    %v1020 = vunpack.c.l.b16 %v984
    %v1021 = vunpack.c.l.b16 %v985
    %v1022 = vunpack.c.l.b16 %v986
    %v1023 = vunpack.c.l.b16 %v987
    %v1024 = vunpack.c.l.b16 %v988
    %v1025 = vunpack.c.l.b16 %v989
    %v1026 = vunpack.c.l.b16 %v990
    %v1027 = vunpack.c.l.b16 %v991
    %v1028 = vunpack.c.l.b16 %v992
    %v1029 = vunpack.c.l.b16 %v993
    %v1030 = vunpack.c.l.b16 %v994
    %v1031 = vunpack.c.l.b16 %v995
    %v1032 = vpack.c.b16 %v1017, %v1016
    %v1033 = vpack.c.b16 %v1019, %v1018
    %v1034 = vpack.c.b16 %v1021, %v1020
    %v1035 = vpack.c.b16 %v1023, %v1022
    %v1036 = vpack.c.b16 %v1025, %v1024
    %v1037 = vpack.c.b16 %v1027, %v1026
    %v1038 = vpack.c.b16 %v1029, %v1028
    %v1039 = vpack.c.b16 %v1031, %v1030
    %1048 = vmatprep.subr.bf16.mxu0 0
    %1049 = vmatpush1.bf16.msra.mxu0 %v1032
    %1050 = vmatprep.subr.bf16.mxu0 0
    %1051 = vmatpush1.bf16.msra.mxu0 %v1033
    %1052 = vmatprep.subr.bf16.mxu0 0
    %1053 = vmatpush1.bf16.msra.mxu0 %v1034
    %1054 = vmatprep.subr.bf16.mxu0 0
    %1055 = vmatpush1.bf16.msra.mxu0 %v1035
    %1056 = vmatprep.subr.bf16.mxu0 0
    %1057 = vmatpush1.bf16.msra.mxu0 %v1036
    %1058 = vmatprep.subr.bf16.mxu0 0
    %1059 = vmatpush1.bf16.msra.mxu0 %v1037
    %1060 = vmatprep.subr.bf16.mxu0 0
    %1061 = vmatpush1.bf16.msra.mxu0 %v1038
    %1062 = vmatprep.subr.bf16.mxu0 0
    %1063 = vmatpush1.bf16.msra.mxu0 %v1039
    %1064 = vmatprep.subr.bf16.mxu0 0
    %1065 = vmatpush1.bf16.msra.mxu0 0
    %1066 = vmatprep.subr.bf16.mxu0 0
    %1067 = vmatpush1.bf16.msra.mxu0 0
    %1068 = vmatprep.subr.bf16.mxu0 0
    %1069 = vmatpush1.bf16.msra.mxu0 0
    %1070 = vmatprep.subr.bf16.mxu0 0
    %1071 = vmatpush1.bf16.msra.mxu0 0
    %1072 = vmatprep.subr.bf16.mxu0 0
    %1073 = vmatpush1.bf16.msra.mxu0 0
    %1074 = vmatprep.subr.bf16.mxu0 0
    %1075 = vmatpush1.bf16.msra.mxu0 0
    %1076 = vmatprep.subr.bf16.mxu0 0
    %1077 = vmatpush1.bf16.msra.mxu0 0
    %1078 = vmatprep.subr.bf16.mxu0 0
    %1079 = vmatpush1.bf16.msra.mxu0 0
    %1080 = vmatprep.mubr.bf16.mxu0 0
    %1081 = vmatmul.mubr.bf16.gmra.mrb[0].mxu0 %v978
    %v1082 = vpop.f32.mrb[0].mxu0
    %v1083 = vadd.f32 %v999, %v1082
    %v1084 = vpop.f32.mrb[0].mxu0
    %v1085 = vpop.f32.mrb[0].mxu0
    %v1086 = vadd.f32 %v999, %v1085
    %v1087 = vpop.f32.mrb[0].mxu0
    %1088 = vdwg.mxu0
    %vm1089 = vcmp.gt.f32.partialorder %v61, 0.0
    %v1090 = vsel %vm1089, 1, 0
    %v1091 = vlaneseq
    %v1092 = vshrl.u32 %v1091, 7
    %v1093 = vsub.s32 2, %v1092
    %v1094 = vrot.slane %v1090, %v1093
    %vm1095 = vcmp.eq.s32.totalorder %v1094, 1
    %v1096 = vsel %vm1095, %v1083, -1e+30
    %v1097 = vsel %vm1095, %v1086, -1e+30
    %1098 = vmax.xlane.f32.xlu0 %v1096
    %v1099 = vpop.xlane.xlu0 %1098
    %1100 = vmax.xlane.f32.xlu0 %v1097
    %v1101 = vpop.xlane.xlu0 %1100
    %v1102 = vsub.f32 %v1096, %v1099
    %v1103 = vsub.f32 %v1097, %v1101
    %v1104 = vmul.f32 %v1102, 1.442695
    %v1105 = vpow.pop %v1104
    %v1106 = vmul.f32 %v1103, 1.442695
    %v1107 = vpow.pop %v1106
    %v1108 = vsel %vm1095, %v1105, 0.0
    %v1109 = vsel %vm1095, %v1107, 0.0
    %1110 = vadd.xlane.f32.xlu0 %v1108
    %v1111 = vpop.xlane.xlu0 %1110
    %1112 = vadd.xlane.f32.xlu0 %v1109
    %v1113 = vpop.xlane.xlu0 %1112
    %v1114 = vlog2.pop %v1111
    %v1115 = vmul.f32 %v1114, 0.6931472
    %v1116 = vlog2.pop %v1113
    %v1117 = vmul.f32 %v1116, 0.6931472
    %v1118 = vsub.f32 %v1102, %v1115
    %v1119 = vsub.f32 %v1103, %v1117
    %v1120 = vsel %vm1095, %v1118, 0.0
    %v1121 = vsel %vm1095, %v1119, 0.0
    %1122 = vst [vmem:[#allocation5] sm:$0xff] %v1120
    %1123 = vst [vmem:[#allocation5 + $0x8] sm:$0xff] %v1121
    // Predicated region
    $region22: #{gin_forward_padded.1} parent=1 // pred_check
      _
    $region23: #{gin_forward_padded.1} parent=1 // pred_check_branch
      %1125 = sbr.rel (0) target = $region25
    $region24: #{gin_forward_padded.1} parent=1 // pred_region
      %s1127 = ssub.s32 256, 256
      %1128 = vsyncadd [#allocation4], %s1127
      %s1129 = sshll.u32 [#allocation5], 4
      %s1130 = int_to_ptr.vmem [resolvable:$true] %s1129
      %1135 = dma.vmem_to_hbm [thread:$0]  %s1130, 256, %s4, [#allocation4], 128, 128, 8
    $region25: #{gin_forward_padded.1} parent=1 // pred_fallthru
      _
    // Predicated region
    $region26: #{gin_forward_padded.1} parent=1 // pred_check
      _
    $region27: #{gin_forward_padded.1} parent=1 // pred_check_branch
      %1137 = sbr.rel (0) target = $region29
    $region28: #{gin_forward_padded.1} parent=1 // pred_region
      %1138 = dma.done [#allocation4], 256
    $region29: #{gin_forward_padded.1} parent=1 // pred_fallthru
      _
    %1139 = vsyncpa [#allocation3], 1
    %1140 = vsyncpa [#allocation4], 1

</llo_original>
